<compile_context>
chip_gen: v6e
topology: v6e:2x2x1
jax: 0.10.0
libtpu: 0.0.40
codegen_flags: <defaults>
</compile_context>

<pallas_src>
import functools

import jax
import jax.numpy as jnp
from jax import lax
from jax.experimental import pallas as pl
from jax.experimental.pallas import tpu as pltpu


def _flash_attn_kernel(xq_ref, xkv_ref, wq_ref, wkv_ref, o_ref,
                       q_sc, m_sc, l_sc, acc_sc, *, scale, d_out_p):
    ki = pl.program_id(1)

    @pl.when(ki == 0)
    def _init():
        # Project the resident Q tile once per q-block (bf16 operands, f32 acc).
        q_sc[...] = jnp.dot(
            xq_ref[...].astype(jnp.bfloat16),
            wq_ref[...].astype(jnp.bfloat16),
            preferred_element_type=jnp.float32,
        ).astype(jnp.bfloat16)
        m_sc[...] = jnp.full_like(m_sc, -jnp.inf)
        l_sc[...] = jnp.zeros_like(l_sc)
        acc_sc[...] = jnp.zeros_like(acc_sc)

    # Fused K/V projection for this kv tile: one MXU pass -> (tkv, 2*d_out_p).
    kv = jnp.dot(
        xkv_ref[...].astype(jnp.bfloat16),
        wkv_ref[...].astype(jnp.bfloat16),
        preferred_element_type=jnp.float32,
    )
    k = kv[:, :d_out_p].astype(jnp.bfloat16)
    v = kv[:, d_out_p:].astype(jnp.bfloat16)

    # scores = Q @ K^T without materializing a transpose (contract last dims).
    s = lax.dot_general(
        q_sc[...], k,
        dimension_numbers=(((1,), (1,)), ((), ())),
        preferred_element_type=jnp.float32,
    )
    s = s * scale

    # Online (numerically stable) softmax, all f32.
    m_prev = m_sc[...]
    m_new = jnp.maximum(m_prev, jnp.max(s, axis=-1, keepdims=True))
    alpha = jnp.exp(m_prev - m_new)
    p = jnp.exp(s - m_new)
    l_sc[...] = alpha * l_sc[...] + jnp.sum(p, axis=-1, keepdims=True)
    acc_sc[...] = alpha * acc_sc[...] + jnp.dot(
        p.astype(jnp.bfloat16), v, preferred_element_type=jnp.float32)
    m_sc[...] = m_new

    @pl.when(ki == pl.num_programs(1) - 1)
    def _finalize():
        inv_l = pl.reciprocal(l_sc[...], approx=True)
        o_ref[...] = (acc_sc[...] * inv_l).astype(o_ref.dtype)


def _round_up(n, m):
    return ((n + m - 1) // m) * m


def self_attention(x, w_query, w_key, w_value, *, q_tile=256, kv_tile=512):
    """x: (S, d_in); w_*: (d_in, d_out) (transpose of torch Linear weight).

    Returns (S, d_out) == softmax((x Wq)(x Wk)^T / sqrt(d_out)) @ (x Wv).
    """
    S, d_in = x.shape
    d_out = w_query.shape[1]

    # Lane-dense padding of the feature dims (zeros -> mathematically inert).
    d_in_p = _round_up(d_in, 128)
    d_out_p = _round_up(d_out, 128)

    def pad2(a, rows, cols):
        return jnp.pad(a, ((0, rows - a.shape[0]), (0, cols - a.shape[1])))

    x_p = pad2(x, S, d_in_p)
    wq_p = pad2(w_query, d_in_p, d_out_p)
    wkv_p = jnp.concatenate(
        [pad2(w_key, d_in_p, d_out_p), pad2(w_value, d_in_p, d_out_p)], axis=1)

    # TODO(synk): pad + mask the sequence axis for S not divisible by the tiles;
    # for now fall back to a single tile along that axis.
    tq = q_tile if (S % q_tile == 0) else S
    tkv = kv_tile if (S % kv_tile == 0) else S

    scale = 1.0 / float(d_out) ** 0.5  # keys.shape[-1] ** 0.5 in the torch code

    kernel = functools.partial(_flash_attn_kernel, scale=scale, d_out_p=d_out_p)

    out_p = pl.pallas_call(
        kernel,
        out_shape=jax.ShapeDtypeStruct((S, d_out_p), x.dtype),
        grid_spec=pltpu.PrefetchScalarGridSpec(
            num_scalar_prefetch=0,
            grid=(S // tq, S // tkv),
            in_specs=[
                # Q-tile of x: constant across kv axis -> resident, no re-DMA.
                pl.BlockSpec((tq, d_in_p), lambda qi, ki: (qi, 0)),
                # KV-tile of x: streamed along the kv axis.
                pl.BlockSpec((tkv, d_in_p), lambda qi, ki: (ki, 0)),
                # Weights: constant index_map -> stay resident in VMEM.
                pl.BlockSpec((d_in_p, d_out_p), lambda qi, ki: (0, 0)),
                pl.BlockSpec((d_in_p, 2 * d_out_p), lambda qi, ki: (0, 0)),
            ],
            out_specs=pl.BlockSpec((tq, d_out_p), lambda qi, ki: (qi, 0)),
            scratch_shapes=[
                pltpu.VMEM((tq, d_out_p), jnp.bfloat16),   # q tile
                pltpu.VMEM((tq, 1), jnp.float32),          # running max m
                pltpu.VMEM((tq, 1), jnp.float32),          # running sum l
                pltpu.VMEM((tq, d_out_p), jnp.float32),    # output accumulator
            ],
        ),
        compiler_params=pltpu.CompilerParams(
            dimension_semantics=("parallel", "arbitrary"),
        ),
    )(x_p, x_p, wq_p, wkv_p)

    return out_p[:, :d_out]


def _reference(x, wq, wk, wv):
    """Pure-JAX f32 reference mirroring the PyTorch forward."""
    q = x @ wq
    k = x @ wk
    v = x @ wv
    scores = q @ k.T
    w = jax.nn.softmax(scores / (k.shape[-1] ** 0.5), axis=-1)
    return w @ v


if __name__ == "__main__":
    key = jax.random.PRNGKey(0)
    seq_len, d_in, d_out = 8, 32, 32   # qkv_bias=False -> no bias terms

    kx, kq, kk, kv = jax.random.split(key, 4)
    x = jax.random.normal(kx, (seq_len, d_in), dtype=jnp.float32)
    # Deterministic init mimicking nn.Linear's uniform(-1/sqrt(d_in), 1/sqrt(d_in)),
    # stored already transposed to (d_in, d_out).
    bound = 1.0 / (d_in ** 0.5)
    w_query = jax.random.uniform(kq, (d_in, d_out), jnp.float32, -bound, bound)
    w_key = jax.random.uniform(kk, (d_in, d_out), jnp.float32, -bound, bound)
    w_value = jax.random.uniform(kv, (d_in, d_out), jnp.float32, -bound, bound)

    out = jax.block_until_ready(self_attention(x, w_query, w_key, w_value))

    ref = _reference(x, w_query, w_key, w_value)
    assert out.shape == (seq_len, d_out)
    # bf16 MXU operands + approx reciprocal -> relaxed tolerance vs f32 reference.
    max_err = float(jnp.max(jnp.abs(out - ref)))
    assert jnp.allclose(out, ref, atol=2e-2, rtol=2e-2), (
        f"mismatch vs reference (max abs err {max_err})")

    print("KERNEL_OK")
</pallas_src>

<mosaic_0001>
module attributes {stable_mosaic.version = 11 : i64} {
  func.func @_flash_attn_kernel(%arg0: i32, %arg1: i32, %arg2: memref<8x128xf32, #tpu.memory_space<vmem>>, %arg3: memref<8x128xf32, #tpu.memory_space<vmem>>, %arg4: memref<128x128xf32, #tpu.memory_space<vmem>>, %arg5: memref<128x256xf32, #tpu.memory_space<vmem>>, %arg6: memref<8x128xf32, #tpu.memory_space<vmem>>, %arg7: memref<8x128xbf16, #tpu.memory_space<vmem>>, %arg8: memref<8x1xf32, #tpu.memory_space<vmem>>, %arg9: memref<8x1xf32, #tpu.memory_space<vmem>>, %arg10: memref<8x128xf32, #tpu.memory_space<vmem>>) attributes {dimension_semantics = [#tpu.dimension_semantics<parallel>, #tpu.dimension_semantics<arbitrary>], iteration_bounds = array<i64: 1, 1>, scalar_prefetch = 0 : i64, scratch_operands = 4 : i64, tpu.core_type = #tpu.core_type<tc>, window_params = [{transform_indices = @transform_0, window_bounds = array<i64: 8, 128>}, {transform_indices = @transform_1, window_bounds = array<i64: 8, 128>}, {pipeline_mode = #tpu.pipeline_mode<synchronous>, transform_indices = @transform_2, window_bounds = array<i64: 128, 128>}, {pipeline_mode = #tpu.pipeline_mode<synchronous>, transform_indices = @transform_3, window_bounds = array<i64: 128, 256>}, {transform_indices = @transform_4, window_bounds = array<i64: 8, 128>}]} {
    %c0_i32 = arith.constant 0 : i32
    %0 = arith.cmpi eq, %arg1, %c0_i32 : i32
    %1 = arith.extui %0 : i1 to i32
    %c0_i32_0 = arith.constant 0 : i32
    %2 = arith.cmpi ne, %1, %c0_i32_0 : i32
    scf.if %2 {
      %c0_25 = arith.constant 0 : index
      %c0_26 = arith.constant 0 : index
      %42 = vector.load %arg2[%c0_25, %c0_26] : memref<8x128xf32, #tpu.memory_space<vmem>>, vector<8x128xf32>
      %43 = arith.truncf %42 : vector<8x128xf32> to vector<8x128xbf16>
      %c0_27 = arith.constant 0 : index
      %c0_28 = arith.constant 0 : index
      %44 = vector.load %arg4[%c0_27, %c0_28] : memref<128x128xf32, #tpu.memory_space<vmem>>, vector<128x128xf32>
      %45 = arith.truncf %44 : vector<128x128xf32> to vector<128x128xbf16>
      %cst_29 = arith.constant dense<0.000000e+00> : vector<8x128xf32>
      %46 = tpu.matmul %43, %45, %cst_29 {dimension_numbers = #tpu.dot_dimension_numbers<[1], [0], [0], [1], [0, 0, 1, 1], [], []>} : vector<8x128xbf16>, vector<128x128xbf16>, vector<8x128xf32> -> vector<8x128xf32>
      %47 = arith.truncf %46 : vector<8x128xf32> to vector<8x128xbf16>
      %c0_30 = arith.constant 0 : index
      %c0_31 = arith.constant 0 : index
      %48 = vector.load %arg7[%c0_30, %c0_31] : memref<8x128xbf16, #tpu.memory_space<vmem>>, vector<8x128xbf16>
      tpu.vector_store %arg7[%c0_30, %c0_31], %47 {strides = array<i32>} : memref<8x128xbf16, #tpu.memory_space<vmem>>, vector<8x128xbf16>,
      %cst_32 = arith.constant 0xFF800000 : f32
      %49 = vector.broadcast %cst_32 : f32 to vector<8x1xf32>
      %c0_33 = arith.constant 0 : index
      %c0_34 = arith.constant 0 : index
      %50 = vector.load %arg8[%c0_33, %c0_34] : memref<8x1xf32, #tpu.memory_space<vmem>>, vector<8x1xf32>
      tpu.vector_store %arg8[%c0_33, %c0_34], %49 {strides = array<i32>} : memref<8x1xf32, #tpu.memory_space<vmem>>, vector<8x1xf32>,
      %cst_35 = arith.constant 0.000000e+00 : f32
      %51 = vector.broadcast %cst_35 : f32 to vector<8x1xf32>
      %c0_36 = arith.constant 0 : index
      %c0_37 = arith.constant 0 : index
      %52 = vector.load %arg9[%c0_36, %c0_37] : memref<8x1xf32, #tpu.memory_space<vmem>>, vector<8x1xf32>
      tpu.vector_store %arg9[%c0_36, %c0_37], %51 {strides = array<i32>} : memref<8x1xf32, #tpu.memory_space<vmem>>, vector<8x1xf32>,
      %cst_38 = arith.constant 0.000000e+00 : f32
      %53 = vector.broadcast %cst_38 : f32 to vector<8x128xf32>
      %c0_39 = arith.constant 0 : index
      %c0_40 = arith.constant 0 : index
      %54 = vector.load %arg10[%c0_39, %c0_40] : memref<8x128xf32, #tpu.memory_space<vmem>>, vector<8x128xf32>
      tpu.vector_store %arg10[%c0_39, %c0_40], %53 {strides = array<i32>} : memref<8x128xf32, #tpu.memory_space<vmem>>, vector<8x128xf32>,
    } else {
    }
    %c0 = arith.constant 0 : index
    %c0_1 = arith.constant 0 : index
    %3 = vector.load %arg3[%c0, %c0_1] : memref<8x128xf32, #tpu.memory_space<vmem>>, vector<8x128xf32>
    %4 = arith.truncf %3 : vector<8x128xf32> to vector<8x128xbf16>
    %c0_2 = arith.constant 0 : index
    %c0_3 = arith.constant 0 : index
    %5 = vector.load %arg5[%c0_2, %c0_3] : memref<128x256xf32, #tpu.memory_space<vmem>>, vector<128x256xf32>
    %6 = arith.truncf %5 : vector<128x256xf32> to vector<128x256xbf16>
    %cst = arith.constant dense<0.000000e+00> : vector<8x256xf32>
    %7 = tpu.matmul %4, %6, %cst {dimension_numbers = #tpu.dot_dimension_numbers<[1], [0], [0], [1], [0, 0, 1, 1], [], []>} : vector<8x128xbf16>, vector<128x256xbf16>, vector<8x256xf32> -> vector<8x256xf32>
    %8 = vector.extract_strided_slice %7 {offsets = [0, 0], sizes = [8, 128], strides = [1, 1]} : vector<8x256xf32> to vector<8x128xf32>
    %9 = arith.truncf %8 : vector<8x128xf32> to vector<8x128xbf16>
    %10 = vector.extract_strided_slice %7 {offsets = [0, 128], sizes = [8, 128], strides = [1, 1]} : vector<8x256xf32> to vector<8x128xf32>
    %11 = arith.truncf %10 : vector<8x128xf32> to vector<8x128xbf16>
    %c0_4 = arith.constant 0 : index
    %c0_5 = arith.constant 0 : index
    %12 = vector.load %arg7[%c0_4, %c0_5] : memref<8x128xbf16, #tpu.memory_space<vmem>>, vector<8x128xbf16>
    %cst_6 = arith.constant dense<0.000000e+00> : vector<8x8xf32>
    %13 = tpu.matmul %12, %9, %cst_6 {dimension_numbers = #tpu.dot_dimension_numbers<[1], [1], [0], [0], [0, 0, 1, 0], [], []>} : vector<8x128xbf16>, vector<8x128xbf16>, vector<8x8xf32> -> vector<8x8xf32>
    %cst_7 = arith.constant 0.176776692 : f32
    %14 = vector.broadcast %cst_7 : f32 to vector<8x8xf32>
    %15 = arith.mulf %13, %14 : vector<8x8xf32>
    %c0_8 = arith.constant 0 : index
    %c0_9 = arith.constant 0 : index
    %16 = vector.load %arg8[%c0_8, %c0_9] : memref<8x1xf32, #tpu.memory_space<vmem>>, vector<8x1xf32>
    %cst_10 = arith.constant dense<0xFF800000> : vector<8xf32>
    %17 = vector.multi_reduction <maximumf>, %15, %cst_10 [1] : vector<8x8xf32> to vector<8xf32>
    %18 = vector.shape_cast %17 : vector<8xf32> to vector<8x1xf32>
    %19 = arith.maximumf %16, %18 : vector<8x1xf32>
    %20 = arith.subf %16, %19 : vector<8x1xf32>
    %21 = math.exp %20 : vector<8x1xf32>
    %22 = vector.broadcast %19 : vector<8x1xf32> to vector<8x8xf32>
    %23 = arith.subf %15, %22 : vector<8x8xf32>
    %24 = math.exp %23 : vector<8x8xf32>
    %c0_11 = arith.constant 0 : index
    %c0_12 = arith.constant 0 : index
    %25 = vector.load %arg9[%c0_11, %c0_12] : memref<8x1xf32, #tpu.memory_space<vmem>>, vector<8x1xf32>
    %26 = arith.mulf %21, %25 : vector<8x1xf32>
    %cst_13 = arith.constant dense<0.000000e+00> : vector<8xf32>
    %27 = vector.multi_reduction <add>, %24, %cst_13 [1] : vector<8x8xf32> to vector<8xf32>
    %28 = vector.shape_cast %27 : vector<8xf32> to vector<8x1xf32>
    %29 = arith.addf %26, %28 : vector<8x1xf32>
    %c0_14 = arith.constant 0 : index
    %c0_15 = arith.constant 0 : index
    %30 = vector.load %arg9[%c0_14, %c0_15] : memref<8x1xf32, #tpu.memory_space<vmem>>, vector<8x1xf32>
    tpu.vector_store %arg9[%c0_14, %c0_15], %29 {strides = array<i32>} : memref<8x1xf32, #tpu.memory_space<vmem>>, vector<8x1xf32>,
    %c0_16 = arith.constant 0 : index
    %c0_17 = arith.constant 0 : index
    %31 = vector.load %arg10[%c0_16, %c0_17] : memref<8x128xf32, #tpu.memory_space<vmem>>, vector<8x128xf32>
    %32 = vector.broadcast %21 : vector<8x1xf32> to vector<8x128xf32>
    %33 = arith.mulf %32, %31 : vector<8x128xf32>
    %34 = arith.truncf %24 : vector<8x8xf32> to vector<8x8xbf16>
    %cst_18 = arith.constant dense<0.000000e+00> : vector<8x128xf32>
    %35 = tpu.matmul %34, %11, %cst_18 {dimension_numbers = #tpu.dot_dimension_numbers<[1], [0], [0], [1], [0, 0, 1, 1], [], []>} : vector<8x8xbf16>, vector<8x128xbf16>, vector<8x128xf32> -> vector<8x128xf32>
    %36 = arith.addf %33, %35 : vector<8x128xf32>
    %c0_19 = arith.constant 0 : index
    %c0_20 = arith.constant 0 : index
    %37 = vector.load %arg10[%c0_19, %c0_20] : memref<8x128xf32, #tpu.memory_space<vmem>>, vector<8x128xf32>
    tpu.vector_store %arg10[%c0_19, %c0_20], %36 {strides = array<i32>} : memref<8x128xf32, #tpu.memory_space<vmem>>, vector<8x128xf32>,
    %c0_21 = arith.constant 0 : index
    %c0_22 = arith.constant 0 : index
    %38 = vector.load %arg8[%c0_21, %c0_22] : memref<8x1xf32, #tpu.memory_space<vmem>>, vector<8x1xf32>
    tpu.vector_store %arg8[%c0_21, %c0_22], %19 {strides = array<i32>} : memref<8x1xf32, #tpu.memory_space<vmem>>, vector<8x1xf32>,
    %c0_i32_23 = arith.constant 0 : i32
    %39 = arith.cmpi eq, %arg1, %c0_i32_23 : i32
    %40 = arith.extui %39 : i1 to i32
    %c0_i32_24 = arith.constant 0 : i32
    %41 = arith.cmpi ne, %40, %c0_i32_24 : i32
    scf.if %41 {
      %c0_25 = arith.constant 0 : index
      %c0_26 = arith.constant 0 : index
      %42 = vector.load %arg9[%c0_25, %c0_26] : memref<8x1xf32, #tpu.memory_space<vmem>>, vector<8x1xf32>
      %43 = tpu.reciprocal %42 {approx = true} : vector<8x1xf32> -> vector<8x1xf32>
      %c0_27 = arith.constant 0 : index
      %c0_28 = arith.constant 0 : index
      %44 = vector.load %arg10[%c0_27, %c0_28] : memref<8x128xf32, #tpu.memory_space<vmem>>, vector<8x128xf32>
      %45 = vector.broadcast %43 : vector<8x1xf32> to vector<8x128xf32>
      %46 = arith.mulf %44, %45 : vector<8x128xf32>
      %c0_29 = arith.constant 0 : index
      %c0_30 = arith.constant 0 : index
      %47 = vector.load %arg6[%c0_29, %c0_30] : memref<8x128xf32, #tpu.memory_space<vmem>>, vector<8x128xf32>
      tpu.vector_store %arg6[%c0_29, %c0_30], %46 {strides = array<i32>} : memref<8x128xf32, #tpu.memory_space<vmem>>, vector<8x128xf32>,
    } else {
    }
    return
  }
  func.func @transform_0(%arg0: i32, %arg1: i32) -> (i32, i32) {
    %c0_i32 = arith.constant 0 : i32
    %c0_i32_0 = arith.constant 0 : i32
    return %arg0, %c0_i32 : i32, i32
  }
  func.func @transform_1(%arg0: i32, %arg1: i32) -> (i32, i32) {
    %c0_i32 = arith.constant 0 : i32
    %c0_i32_0 = arith.constant 0 : i32
    return %arg1, %c0_i32 : i32, i32
  }
  func.func @transform_2(%arg0: i32, %arg1: i32) -> (i32, i32) {
    %c0_i32 = arith.constant 0 : i32
    %c0_i32_0 = arith.constant 0 : i32
    %c0_i32_1 = arith.constant 0 : i32
    return %c0_i32, %c0_i32_0 : i32, i32
  }
  func.func @transform_3(%arg0: i32, %arg1: i32) -> (i32, i32) {
    %c0_i32 = arith.constant 0 : i32
    %c0_i32_0 = arith.constant 0 : i32
    %c0_i32_1 = arith.constant 0 : i32
    return %c0_i32, %c0_i32_0 : i32, i32
  }
  func.func @transform_4(%arg0: i32, %arg1: i32) -> (i32, i32) {
    %c0_i32 = arith.constant 0 : i32
    %c0_i32_0 = arith.constant 0 : i32
    return %arg0, %c0_i32 : i32, i32
  }
}

</mosaic_0001>

<llo_original>
// kernel: tpu_custom_call.1
$region0: #{tpu_custom_call.1}
  #allocation0 [shape = 'u32[]', space=smem, size = 0x4, offset = 0x4, fixed_abs, tag = 'smem constant byte address 0x4 - core index']
  #allocation1 [shape = 'u32[144,128]{1,0:T(1,128)}', space=vmem, size = 0x12000, scoped, tag = 'internal scratch']
  #allocation2 [shape = 'bf16[8,128]{1,0:T(8,128)(2,1)}', space=vmem, size = 0x800, scoped, tag = 'scratch operand']
  #allocation3 [shape = 'f32[8,1]{1,0:T(8,128)}', space=vmem, size = 0x1000, scoped, tag = 'scratch operand']
  #allocation4 [shape = 'f32[8,1]{1,0:T(8,128)}', space=vmem, size = 0x1000, scoped, tag = 'scratch operand']
  #allocation5 [shape = 'f32[8,128]{1,0:T(8,128)}', space=vmem, size = 0x1000, scoped, tag = 'scratch operand']
  %s0 = inlined_call_operand.hbm [shape: f32[8,128], index: 0, kind: input, shape index: {}]
  %s1 = inlined_call_operand.hbm [shape: f32[8,128], index: 1, kind: input, shape index: {}]
  %s2 = inlined_call_operand.hbm [shape: f32[128,128], index: 2, kind: input, shape index: {}]
  %s3 = inlined_call_operand.hbm [shape: f32[128,256], index: 3, kind: input, shape index: {}]
  %s4 = inlined_call_operand.hbm [shape: f32[8,128], index: 4, kind: output, shape index: {}]
  %s5 = sld [smem:[#allocation0]]
  $region50: #{tpu_custom_call.1} parent=0
    _
  %s7 = ssub.s32 1, %s5
  %s8 = scalar_select 0, %s7, %s5
  $region1: #{tpu_custom_call.1} parent=0
    #allocation6 [shape = 'u8[4096]{0}', space=vmem, size = 0x1000, scoped, tag = 'input window, operand 0, single buffered']
    #allocation7 [shape = 's32[1]{0}', space=sflag, size = 0x4, scoped, tag = 'scoped memory for tpu_custom_call.1']
    #allocation8 [shape = 's32[1]{0}', space=sflag, size = 0x4, scoped, tag = 'scoped memory for tpu_custom_call.1']
    #allocation9 [shape = 'u8[4096]{0}', space=vmem, size = 0x1000, scoped, tag = 'input window, operand 1, single buffered']
    #allocation10 [shape = 's32[1]{0}', space=sflag, size = 0x4, scoped, tag = 'scoped memory for tpu_custom_call.1']
    #allocation11 [shape = 'u8[65536]{0}', space=vmem, size = 0x10000, scoped, tag = 'input window, operand 2, single buffered']
    #allocation12 [shape = 'u8[131072]{0}', space=vmem, size = 0x20000, scoped, tag = 'input window, operand 3, single buffered']
    #allocation13 [shape = 's32[1]{0}', space=sflag, size = 0x4, scoped, tag = 'scoped memory for tpu_custom_call.1']
    #allocation14 [shape = 'u8[4096]{0}', space=vmem, size = 0x1000, scoped, tag = 'output window, operand 0, single buffered']
    %9 = vsyncpa [#allocation7], 0
    %10 = vsyncpa [#allocation10], 0
    %11 = vsyncpa [#allocation13], 0
    %12 = vsyncpa [#allocation8], 0
    // Predicated region
    $region2: #{tpu_custom_call.1} parent=1 // pred_check
      _
    $region3: #{tpu_custom_call.1} parent=1 // pred_check_branch
      %14 = sbr.rel (0) target = $region5
    $region4: #{tpu_custom_call.1} parent=1 // pred_region
      %s16 = ssub.s32 128, 128
      %17 = vsyncadd [#allocation7], %s16
      %s19 = sshll.u32 [#allocation6], 4
      %s20 = int_to_ptr.vmem [resolvable:$true] %s19
      %22 = dma.hbm_to_vmem [thread:$0]  %s0, 128, %s20, [#allocation7]
    $region5: #{tpu_custom_call.1} parent=1 // pred_fallthru
      _
    // Predicated region
    $region6: #{tpu_custom_call.1} parent=1 // pred_check
      _
    $region7: #{tpu_custom_call.1} parent=1 // pred_check_branch
      %24 = sbr.rel (0) target = $region9
    $region8: #{tpu_custom_call.1} parent=1 // pred_region
      %s26 = ssub.s32 128, 128
      %27 = vsyncadd [#allocation10], %s26
      %s29 = sshll.u32 [#allocation9], 4
      %s30 = int_to_ptr.vmem [resolvable:$true] %s29
      %32 = dma.hbm_to_vmem [thread:$0]  %s1, 128, %s30, [#allocation10]
    $region9: #{tpu_custom_call.1} parent=1 // pred_fallthru
      _
    // Predicated region
    $region10: #{tpu_custom_call.1} parent=1 // pred_check
      _
    $region11: #{tpu_custom_call.1} parent=1 // pred_check_branch
      %34 = sbr.rel (0) target = $region13
    $region12: #{tpu_custom_call.1} parent=1 // pred_region
      %s36 = ssub.s32 2048, 2048
      %37 = vsyncadd [#allocation10], %s36
      %s38 = sshll.u32 [#allocation11], 4
      %s39 = int_to_ptr.vmem [resolvable:$true] %s38
      %44 = dma.hbm_to_vmem [thread:$0]  %s2, 2048, %s39, [#allocation10], 128, 128, 8
    $region13: #{tpu_custom_call.1} parent=1 // pred_fallthru
      _
    // Predicated region
    $region14: #{tpu_custom_call.1} parent=1 // pred_check
      _
    $region15: #{tpu_custom_call.1} parent=1 // pred_check_branch
      %46 = sbr.rel (0) target = $region17
    $region16: #{tpu_custom_call.1} parent=1 // pred_region
      %s48 = ssub.s32 4096, 4096
      %49 = vsyncadd [#allocation13], %s48
      %s50 = sshll.u32 [#allocation12], 4
      %s51 = int_to_ptr.vmem [resolvable:$true] %s50
      %56 = dma.hbm_to_vmem [thread:$0]  %s3, 4096, %s51, [#allocation13], 256, 256, 16
    $region17: #{tpu_custom_call.1} parent=1 // pred_fallthru
      _
    // Predicated region
    $region18: #{tpu_custom_call.1} parent=1 // pred_check
      _
    $region19: #{tpu_custom_call.1} parent=1 // pred_check_branch
      %58 = sbr.rel (0) target = $region21
    $region20: #{tpu_custom_call.1} parent=1 // pred_region
      %59 = dma.done [#allocation7], 128
    $region21: #{tpu_custom_call.1} parent=1 // pred_fallthru
      _
    // Predicated region
    $region22: #{tpu_custom_call.1} parent=1 // pred_check
      _
    $region23: #{tpu_custom_call.1} parent=1 // pred_check_branch
      %61 = sbr.rel (0) target = $region25
    $region24: #{tpu_custom_call.1} parent=1 // pred_region
      %62 = dma.done [#allocation10], 128
    $region25: #{tpu_custom_call.1} parent=1 // pred_fallthru
      _
    // Predicated region
    $region26: #{tpu_custom_call.1} parent=1 // pred_check
      _
    $region27: #{tpu_custom_call.1} parent=1 // pred_check_branch
      %64 = sbr.rel (0) target = $region29
    $region28: #{tpu_custom_call.1} parent=1 // pred_region
      %65 = dma.done [#allocation10], 2048
    $region29: #{tpu_custom_call.1} parent=1 // pred_fallthru
      _
    // Predicated region
    $region30: #{tpu_custom_call.1} parent=1 // pred_check
      _
    $region31: #{tpu_custom_call.1} parent=1 // pred_check_branch
      %67 = sbr.rel (0) target = $region33
    $region32: #{tpu_custom_call.1} parent=1 // pred_region
      %68 = dma.done [#allocation13], 4096
    $region33: #{tpu_custom_call.1} parent=1 // pred_fallthru
      _
    %p70 = scmp.eq.s32.totalorder 0, 0
    // Predicated region
    $region34: #{tpu_custom_call.1} parent=1 // pred_check
      %p71 = pneg %p70
    $region35: #{tpu_custom_call.1} parent=1 // pred_check_branch
      %73 = sbr.rel (%p71) target = $region37
    $region36: #{tpu_custom_call.1} parent=1 // pred_region
      %v74 = vld [vmem:[#allocation6] sm:$0xff]
      %v75 = vpack.c.bf16 %v74, %v74
      %v76 = vld [vmem:[#allocation11] sm:$0xff]
      %v77 = vld [vmem:[#allocation11 + $0x8] sm:$0xff]
      %v78 = vld [vmem:[#allocation11 + $0x10] sm:$0xff]
      %v79 = vld [vmem:[#allocation11 + $0x18] sm:$0xff]
      %v80 = vld [vmem:[#allocation11 + $0x20] sm:$0xff]
      %v81 = vld [vmem:[#allocation11 + $0x28] sm:$0xff]
      %v82 = vld [vmem:[#allocation11 + $0x30] sm:$0xff]
      %v83 = vld [vmem:[#allocation11 + $0x38] sm:$0xff]
      %v84 = vld [vmem:[#allocation11 + $0x40] sm:$0xff]
      %v85 = vld [vmem:[#allocation11 + $0x48] sm:$0xff]
      %v86 = vld [vmem:[#allocation11 + $0x50] sm:$0xff]
      %v87 = vld [vmem:[#allocation11 + $0x58] sm:$0xff]
      %v88 = vld [vmem:[#allocation11 + $0x60] sm:$0xff]
      %v89 = vld [vmem:[#allocation11 + $0x68] sm:$0xff]
      %v90 = vld [vmem:[#allocation11 + $0x70] sm:$0xff]
      %v91 = vld [vmem:[#allocation11 + $0x78] sm:$0xff]
      %v92 = vpack.c.bf16 %v77, %v76
      %v93 = vpack.c.bf16 %v79, %v78
      %v94 = vpack.c.bf16 %v81, %v80
      %v95 = vpack.c.bf16 %v83, %v82
      %v96 = vpack.c.bf16 %v85, %v84
      %v97 = vpack.c.bf16 %v87, %v86
      %v98 = vpack.c.bf16 %v89, %v88
      %v99 = vpack.c.bf16 %v91, %v90
      %100 = vmatprep.subr.bf16.mxu0 0
      %101 = vmatpush1.bf16.msra.mxu0 %v99
      %102 = vmatprep.subr.bf16.mxu0 0
      %103 = vmatpush1.bf16.msra.mxu0 %v98
      %104 = vmatprep.subr.bf16.mxu0 0
      %105 = vmatpush1.bf16.msra.mxu0 %v97
      %106 = vmatprep.subr.bf16.mxu0 0
      %107 = vmatpush1.bf16.msra.mxu0 %v96
      %108 = vmatprep.subr.bf16.mxu0 0
      %109 = vmatpush1.bf16.msra.mxu0 %v95
      %110 = vmatprep.subr.bf16.mxu0 0
      %111 = vmatpush1.bf16.msra.mxu0 %v94
      %112 = vmatprep.subr.bf16.mxu0 0
      %113 = vmatpush1.bf16.msra.mxu0 %v93
      %114 = vmatprep.subr.bf16.mxu0 0
      %115 = vmatpush1.bf16.msra.mxu0 %v92
      %116 = vmatprep.subr.bf16.mxu0 0
      %117 = vmatpush2.bf16.msra.mxu0 0
      %118 = vmatprep.subr.bf16.mxu0 0
      %119 = vmatpush2.bf16.msra.mxu0 0
      %120 = vmatprep.subr.bf16.mxu0 0
      %121 = vmatpush2.bf16.msra.mxu0 0
      %122 = vmatprep.subr.bf16.mxu0 0
      %123 = vmatpush2.bf16.msra.mxu0 0
      %124 = vmatprep.subr.bf16.mxu0 0
      %125 = vmatpush2.bf16.msra.mxu0 0
      %126 = vmatprep.subr.bf16.mxu0 0
      %127 = vmatpush2.bf16.msra.mxu0 0
      %128 = vmatprep.subr.bf16.mxu0 0
      %129 = vmatpush2.bf16.msra.mxu0 0
      %130 = vmatprep.subr.bf16.mxu0 0
      %131 = vmatpush2.bf16.msra.mxu0 0
      %132 = vmatprep.mubr.bf16.mxu0 0
      %133 = vmatmul.mubr.bf16.gmra.mxu0 %v75
      %v134 = vpop.f32.mrf.mxu0
      %v135 = vadd.f32 0.0, %v134
      %v136 = vpop.f32.mrf.mxu0
      %v137 = vpop.f32.mrf.mxu0
      %v138 = vpop.f32.mrf.mxu0
      %139 = vdwg.mxu0
      %v140 = vpack.c.bf16 %v135, %v135
      %141 = vst [vmem:[#allocation2] sm:$0xf] %v140
      %vm142 = vcmask 7168
      %143 = vst.msk [vmem:[#allocation3] sm:$0xff] %vm142, -inf
      %144 = vst.msk [vmem:[#allocation4] sm:$0xff] %vm142, 0.0
      %145 = vst [vmem:[#allocation5] sm:$0xff] 0.0
    $region37: #{tpu_custom_call.1} parent=1 // pred_fallthru
      _
    %v146 = vld [vmem:[#allocation9] sm:$0xff]
    %v147 = vpack.c.bf16 %v146, %v146
    %v148 = vld [vmem:[#allocation12] sm:$0xff]
    %v149 = vld [vmem:[#allocation12 + $0x8] sm:$0xff]
    %v150 = vld [vmem:[#allocation12 + $0x10] sm:$0xff]
    %v151 = vld [vmem:[#allocation12 + $0x18] sm:$0xff]
    %v152 = vld [vmem:[#allocation12 + $0x20] sm:$0xff]
    %v153 = vld [vmem:[#allocation12 + $0x28] sm:$0xff]
    %v154 = vld [vmem:[#allocation12 + $0x30] sm:$0xff]
    %v155 = vld [vmem:[#allocation12 + $0x38] sm:$0xff]
    %v156 = vld [vmem:[#allocation12 + $0x40] sm:$0xff]
    %v157 = vld [vmem:[#allocation12 + $0x48] sm:$0xff]
    %v158 = vld [vmem:[#allocation12 + $0x50] sm:$0xff]
    %v159 = vld [vmem:[#allocation12 + $0x58] sm:$0xff]
    %v160 = vld [vmem:[#allocation12 + $0x60] sm:$0xff]
    %v161 = vld [vmem:[#allocation12 + $0x68] sm:$0xff]
    %v162 = vld [vmem:[#allocation12 + $0x70] sm:$0xff]
    %v163 = vld [vmem:[#allocation12 + $0x78] sm:$0xff]
    %v164 = vld [vmem:[#allocation12 + $0x80] sm:$0xff]
    %v165 = vld [vmem:[#allocation12 + $0x88] sm:$0xff]
    %v166 = vld [vmem:[#allocation12 + $0x90] sm:$0xff]
    %v167 = vld [vmem:[#allocation12 + $0x98] sm:$0xff]
    %v168 = vld [vmem:[#allocation12 + $0xa0] sm:$0xff]
    %v169 = vld [vmem:[#allocation12 + $0xa8] sm:$0xff]
    %v170 = vld [vmem:[#allocation12 + $0xb0] sm:$0xff]
    %v171 = vld [vmem:[#allocation12 + $0xb8] sm:$0xff]
    %v172 = vld [vmem:[#allocation12 + $0xc0] sm:$0xff]
    %v173 = vld [vmem:[#allocation12 + $0xc8] sm:$0xff]
    %v174 = vld [vmem:[#allocation12 + $0xd0] sm:$0xff]
    %v175 = vld [vmem:[#allocation12 + $0xd8] sm:$0xff]
    %v176 = vld [vmem:[#allocation12 + $0xe0] sm:$0xff]
    %v177 = vld [vmem:[#allocation12 + $0xe8] sm:$0xff]
    %v178 = vld [vmem:[#allocation12 + $0xf0] sm:$0xff]
    %v179 = vld [vmem:[#allocation12 + $0xf8] sm:$0xff]
    %v180 = vpack.c.bf16 %v150, %v148
    %v181 = vpack.c.bf16 %v151, %v149
    %v182 = vpack.c.bf16 %v154, %v152
    %v183 = vpack.c.bf16 %v155, %v153
    %v184 = vpack.c.bf16 %v158, %v156
    %v185 = vpack.c.bf16 %v159, %v157
    %v186 = vpack.c.bf16 %v162, %v160
    %v187 = vpack.c.bf16 %v163, %v161
    %v188 = vpack.c.bf16 %v166, %v164
    %v189 = vpack.c.bf16 %v167, %v165
    %v190 = vpack.c.bf16 %v170, %v168
    %v191 = vpack.c.bf16 %v171, %v169
    %v192 = vpack.c.bf16 %v174, %v172
    %v193 = vpack.c.bf16 %v175, %v173
    %v194 = vpack.c.bf16 %v178, %v176
    %v195 = vpack.c.bf16 %v179, %v177
    %196 = vmatprep.subr.bf16.mxu0 %v195
    %197 = vmatpush1.bf16.msra.mxu0 %v194
    %198 = vmatprep.subr.bf16.mxu0 %v193
    %199 = vmatpush1.bf16.msra.mxu0 %v192
    %200 = vmatprep.subr.bf16.mxu0 %v191
    %201 = vmatpush1.bf16.msra.mxu0 %v190
    %202 = vmatprep.subr.bf16.mxu0 %v189
    %203 = vmatpush1.bf16.msra.mxu0 %v188
    %204 = vmatprep.subr.bf16.mxu0 %v187
    %205 = vmatpush1.bf16.msra.mxu0 %v186
    %206 = vmatprep.subr.bf16.mxu0 %v185
    %207 = vmatpush1.bf16.msra.mxu0 %v184
    %208 = vmatprep.subr.bf16.mxu0 %v183
    %209 = vmatpush1.bf16.msra.mxu0 %v182
    %210 = vmatprep.subr.bf16.mxu0 %v181
    %211 = vmatpush1.bf16.msra.mxu0 %v180
    %212 = vmatprep.subr.bf16.mxu0 0
    %213 = vmatpush2.bf16.msra.mxu0 0
    %214 = vmatprep.subr.bf16.mxu0 0
    %215 = vmatpush2.bf16.msra.mxu0 0
    %216 = vmatprep.subr.bf16.mxu0 0
    %217 = vmatpush2.bf16.msra.mxu0 0
    %218 = vmatprep.subr.bf16.mxu0 0
    %219 = vmatpush2.bf16.msra.mxu0 0
    %220 = vmatprep.subr.bf16.mxu0 0
    %221 = vmatpush2.bf16.msra.mxu0 0
    %222 = vmatprep.subr.bf16.mxu0 0
    %223 = vmatpush2.bf16.msra.mxu0 0
    %224 = vmatprep.subr.bf16.mxu0 0
    %225 = vmatpush2.bf16.msra.mxu0 0
    %226 = vmatprep.subr.bf16.mxu0 0
    %227 = vmatpush2.bf16.msra.mxu0 0
    %228 = vmatprep.mubr.bf16.mxu0 0
    %229 = vmatmul.mubr.bf16.gmra.mxu0 %v147
    %v230 = vpop.f32.mrf.mxu0
    %v231 = vadd.f32 0.0, %v230
    %v232 = vpop.f32.mrf.mxu0
    %v233 = vadd.f32 0.0, %v232
    %v234 = vpop.f32.mrf.mxu0
    %v235 = vpop.f32.mrf.mxu0
    %236 = vdwg.mxu0
    %v237 = vpack.c.bf16 %v231, %v231
    %v238 = vpack.c.bf16 %v233, %v233
    %v239 = vld [vmem:[#allocation2] sm:$0xf]
    %240 = vmatprep.subr.bf16.mxu0 0
    %241 = vmatpush1.bf16.xpose.msra.mxu0 0
    %242 = vmatprep.subr.bf16.mxu0 0
    %243 = vmatpush1.bf16.xpose.msra.mxu0 0
    %244 = vmatprep.subr.bf16.mxu0 0
    %245 = vmatpush1.bf16.xpose.msra.mxu0 0
    %246 = vmatprep.subr.bf16.mxu0 0
    %247 = vmatpush1.bf16.xpose.msra.mxu0 0
    %248 = vmatprep.subr.bf16.mxu0 0
    %249 = vmatpush1.bf16.xpose.msra.mxu0 0
    %250 = vmatprep.subr.bf16.mxu0 0
    %251 = vmatpush1.bf16.xpose.msra.mxu0 0
    %252 = vmatprep.subr.bf16.mxu0 0
    %253 = vmatpush1.bf16.xpose.msra.mxu0 0
    %254 = vmatprep.subr.bf16.mxu0 0
    %255 = vmatpush1.bf16.xpose.msra.mxu0 %v237
    %256 = vmatprep.subr.bf16.mxu0 0
    %257 = vmatpush2.bf16.xpose.msra.mxu0 0
    %258 = vmatprep.subr.bf16.mxu0 0
    %259 = vmatpush2.bf16.xpose.msra.mxu0 0
    %260 = vmatprep.subr.bf16.mxu0 0
    %261 = vmatpush2.bf16.xpose.msra.mxu0 0
    %262 = vmatprep.subr.bf16.mxu0 0
    %263 = vmatpush2.bf16.xpose.msra.mxu0 0
    %264 = vmatprep.subr.bf16.mxu0 0
    %265 = vmatpush2.bf16.xpose.msra.mxu0 0
    %266 = vmatprep.subr.bf16.mxu0 0
    %267 = vmatpush2.bf16.xpose.msra.mxu0 0
    %268 = vmatprep.subr.bf16.mxu0 0
    %269 = vmatpush2.bf16.xpose.msra.mxu0 0
    %270 = vmatprep.subr.bf16.mxu0 0
    %271 = vmatpush2.bf16.xpose.msra.mxu0 0
    %272 = vmatprep.mubr.bf16.mxu0 0
    %273 = vmatmul.mubr.bf16.gmra.mxu0 %v239
    %v274 = vpop.f32.mrf.mxu0
    %v275 = vadd.f32 0.0, %v274
    %v276 = vpop.f32.mrf.mxu0
    %v277 = vpop.f32.mrf.mxu0
    %v278 = vpop.f32.mrf.mxu0
    %279 = vdwg.mxu0
    %v280 = vmul.f32 %v275, 0.17677669
    %v281 = vld [vmem:[#allocation3] sm:$0xff]
    %vm282 = vcmask 64512
    %v283 = vsel %vm282, %v280, -inf
    %284 = vmax.xlane.f32.xlu0 %v283
    %v285 = vpop.xlane.xlu0 %284
    %v286 = vmax.f32 %v281, %v285
    %v287 = vsub.f32 %v281, %v286
    %v288 = vmul.f32 %v287, 1.442695
    %v289 = vpow.pop %v288
    %291 = vset.pattern.permute.xlu0 0
    %292 = vperm.xlu0 %291, %v286
    %v293 = vpop.permute.xlu0 %292
    %v295 = vsub.f32 %v280, %v293
    %v296 = vmul.f32 %v295, 1.442695
    %v297 = vpow.pop %v296
    %v298 = vld [vmem:[#allocation4] sm:$0xff]
    %v299 = vmul.f32 %v289, %v298
    %v300 = vsel %vm282, %v297, 0.0
    %301 = vadd.xlane.f32.xlu0 %v300
    %v302 = vpop.xlane.xlu0 %301
    %v303 = vadd.f32 %v299, %v302
    %vm304 = vcmask 7168
    %305 = vst.msk [vmem:[#allocation4] sm:$0xff] %vm304, %v303
    %v306 = vld [vmem:[#allocation5] sm:$0xff]
    %308 = vset.pattern.permute.xlu0 0
    %309 = vperm.xlu0 %308, %v289
    %v310 = vpop.permute.xlu0 %309
    %v312 = vmul.f32 %v310, %v306
    %v313 = vpack.c.bf16 %v297, %v297
    %v315 = vsel %vm282, %v313, 0
    %vm317 = vcmask 1043456
    %v319 = vsel %vm317, %v238, 0
    %321 = vmatprep.subr.bf16.mxu0 0
    %322 = vmatpush1.bf16.msra.mxu0 0
    %323 = vmatprep.subr.bf16.mxu0 0
    %324 = vmatpush1.bf16.msra.mxu0 0
    %325 = vmatprep.subr.bf16.mxu0 0
    %326 = vmatpush1.bf16.msra.mxu0 0
    %327 = vmatprep.subr.bf16.mxu0 0
    %328 = vmatpush1.bf16.msra.mxu0 0
    %329 = vmatprep.subr.bf16.mxu0 0
    %330 = vmatpush1.bf16.msra.mxu0 0
    %331 = vmatprep.subr.bf16.mxu0 0
    %332 = vmatpush1.bf16.msra.mxu0 0
    %333 = vmatprep.subr.bf16.mxu0 0
    %334 = vmatpush1.bf16.msra.mxu0 0
    %335 = vmatprep.subr.bf16.mxu0 0
    %336 = vmatpush1.bf16.msra.mxu0 %v319
    %337 = vmatprep.subr.bf16.mxu0 0
    %338 = vmatpush2.bf16.msra.mxu0 0
    %339 = vmatprep.subr.bf16.mxu0 0
    %340 = vmatpush2.bf16.msra.mxu0 0
    %341 = vmatprep.subr.bf16.mxu0 0
    %342 = vmatpush2.bf16.msra.mxu0 0
    %343 = vmatprep.subr.bf16.mxu0 0
    %344 = vmatpush2.bf16.msra.mxu0 0
    %345 = vmatprep.subr.bf16.mxu0 0
    %346 = vmatpush2.bf16.msra.mxu0 0
    %347 = vmatprep.subr.bf16.mxu0 0
    %348 = vmatpush2.bf16.msra.mxu0 0
    %349 = vmatprep.subr.bf16.mxu0 0
    %350 = vmatpush2.bf16.msra.mxu0 0
    %351 = vmatprep.subr.bf16.mxu0 0
    %352 = vmatpush2.bf16.msra.mxu0 0
    %353 = vmatprep.mubr.bf16.mxu0 0
    %354 = vmatmul.mubr.bf16.gmra.mxu0 %v315
    %v355 = vpop.f32.mrf.mxu0
    %v356 = vadd.f32 0.0, %v355
    %v357 = vpop.f32.mrf.mxu0
    %v358 = vpop.f32.mrf.mxu0
    %v359 = vpop.f32.mrf.mxu0
    %360 = vdwg.mxu0
    %v361 = vadd.f32 %v312, %v356
    %362 = vst [vmem:[#allocation5] sm:$0xff] %v361
    %363 = vst.msk [vmem:[#allocation3] sm:$0xff] %vm304, %v286
    // Predicated region
    $region38: #{tpu_custom_call.1} parent=1 // pred_check
      %p364 = pneg %p70
    $region39: #{tpu_custom_call.1} parent=1 // pred_check_branch
      %366 = sbr.rel (%p364) target = $region41
    $region40: #{tpu_custom_call.1} parent=1 // pred_region
      %v367 = vld [vmem:[#allocation4] sm:$0xff]
      %v368 = vrcp.pop %v367
      %v369 = vld [vmem:[#allocation5] sm:$0xff]
      %371 = vset.pattern.permute.xlu0 0
      %372 = vperm.xlu0 %371, %v368
      %v373 = vpop.permute.xlu0 %372
      %v375 = vmul.f32 %v369, %v373
      %376 = vst [vmem:[#allocation14] sm:$0xff] %v375
    $region41: #{tpu_custom_call.1} parent=1 // pred_fallthru
      _
    // Predicated region
    $region42: #{tpu_custom_call.1} parent=1 // pred_check
      _
    $region43: #{tpu_custom_call.1} parent=1 // pred_check_branch
      %378 = sbr.rel (0) target = $region45
    $region44: #{tpu_custom_call.1} parent=1 // pred_region
      %s380 = ssub.s32 128, 128
      %381 = vsyncadd [#allocation8], %s380
      %s383 = sshll.u32 [#allocation14], 4
      %s384 = int_to_ptr.vmem [resolvable:$true] %s383
      %386 = dma.vmem_to_hbm [thread:$0]  %s384, 128, %s4, [#allocation8]
    $region45: #{tpu_custom_call.1} parent=1 // pred_fallthru
      _
    // Predicated region
    $region46: #{tpu_custom_call.1} parent=1 // pred_check
      _
    $region47: #{tpu_custom_call.1} parent=1 // pred_check_branch
      %388 = sbr.rel (0) target = $region49
    $region48: #{tpu_custom_call.1} parent=1 // pred_region
      %389 = dma.done [#allocation8], 128
    $region49: #{tpu_custom_call.1} parent=1 // pred_fallthru
      _
    %390 = vsyncpa [#allocation7], 1
    %391 = vsyncpa [#allocation10], 1
    %392 = vsyncpa [#allocation13], 1
    %393 = vsyncpa [#allocation8], 1

</llo_original>
